<compile_context>
chip_gen: v6e
topology: v6e:2x2x1
jax: 0.10.0
libtpu: 0.0.40
codegen_flags: <defaults>
</compile_context>

<pallas_src>
import functools

import jax
import jax.numpy as jnp
from jax.experimental import pallas as pl
from jax.experimental.pallas import tpu as pltpu


def _round_up(x, m):
    return (x + m - 1) // m * m


_SMALL_PATH_VMEM_BUDGET = 8 * 1024 * 1024    # fits default scoped VMEM on v5e/v6e/v7x
_TILED_PATH_VMEM_BUDGET = 20 * 1024 * 1024   # per-step working-set target for tiled path
_TILED_VMEM_LIMIT = 32 * 1024 * 1024         # explicit limit; safe across all chips


def _choose_plan(p, c, nyx, batch_size, itemsize):
    """Pick single-step ("small") path vs. tiled P-reduction path from a VMEM estimate."""
    p_pad128 = _round_up(max(p, 1), 128)      # 128-aligned contraction (K) dim for the MXU
    nyx128 = _round_up(nyx, 128)              # lane-dense, unmasked vst path

    small_bytes = (p_pad128 * batch_size * nyx128          # one-hot slab
                   + c * p_pad128                           # featT
                   + batch_size * c * nyx128                # output (single invocation)
                   + p_pad128 * 128) * itemsize             # gidx (lane-padded to 128)
    if small_bytes <= _SMALL_PATH_VMEM_BUDGET:
        return {"mode": "small", "p_pad": p_pad128, "nyx_pad": nyx128}

    # General path: grid = (batch, col tiles, P tiles[reduction, last, "arbitrary"]).
    p_tile = min(p_pad128, 1024)
    col_tile = 128
    for cand in (2048, 1024, 512, 256, 128):
        est = (p_tile * cand                   # one-hot slab
               + 2 * c * p_tile                # featT tile, double-buffered
               + 2 * p_tile * 128              # gidx tile, double-buffered (lane padded)
               + 3 * c * cand) * itemsize      # f32 accumulator + double-buffered output
        if est <= _TILED_PATH_VMEM_BUDGET:
            col_tile = cand
            break
    return {"mode": "tiled",
            "p_pad": _round_up(p, p_tile),
            "nyx_pad": _round_up(nyx, col_tile),
            "p_tile": p_tile,
            "col_tile": col_tile}


# --------------------------------------------------------------------------- kernels
def _small_kernel(gidx_ref, featT_ref, o_ref, *, batch_size, nyx_pad):
    # gidx_ref:  (P_pad, 1) int32 global flat column (b*nyx_pad + y*nx + x); pad rows = -1
    # featT_ref: (C, P_pad) pillar features transposed; pad columns = 0
    # o_ref:     (batch_size, C, nyx_pad) full canvas (single invocation, no grid)
    gidx = gidx_ref[...]                                                  # (P, 1)
    cols = jax.lax.broadcasted_iota(jnp.int32, (1, batch_size * nyx_pad), 1)
    onehot = (cols == gidx).astype(featT_ref.dtype)                      # (P, B*nyx_pad)
    res = jnp.dot(featT_ref[...], onehot, preferred_element_type=jnp.float32)
    for b in range(batch_size):                                          # static unroll
        o_ref[b] = res[:, b * nyx_pad:(b + 1) * nyx_pad].astype(o_ref.dtype)


def _tiled_kernel(gidx_ref, featT_ref, o_ref, acc_ref, *, nyx_pad, col_tile):
    # grid = (batch b [parallel], column tile j [parallel], P tile k [arbitrary/reduction])
    b = pl.program_id(0)
    j = pl.program_id(1)
    k = pl.program_id(2)

    @pl.when(k == 0)
    def _():
        acc_ref[...] = jnp.zeros_like(acc_ref)

    base = b * nyx_pad + j * col_tile
    gidx_local = gidx_ref[...] - base                                    # (P_tile, 1)
    cols = jax.lax.broadcasted_iota(jnp.int32, (1, col_tile), 1)
    onehot = (cols == gidx_local).astype(featT_ref.dtype)                # (P_tile, col_tile)
    acc_ref[...] += jnp.dot(featT_ref[...], onehot,
                            preferred_element_type=jnp.float32)

    @pl.when(k == pl.num_programs(2) - 1)
    def _():
        o_ref[0] = acc_ref[...].astype(o_ref.dtype)


# --------------------------------------------------------------------------- wrapper
def pointpillars_scatter_pallas(voxel_features, coords, batch_size, ny, nx,
                                compute_dtype=None):
    """voxel_features: (P, C); coords: (P, 4) int (batch, z, y, x) -> (B, C, ny, nx).

    compute_dtype: optional MXU operand dtype (e.g. jnp.bfloat16 on v6e/v7x).  Default None
    keeps the feature dtype (bit-exact vs. the f32 reference)."""
    p, c = voxel_features.shape
    out_dtype = voxel_features.dtype
    nyx = ny * nx

    feat = voxel_features if compute_dtype is None else voxel_features.astype(compute_dtype)
    itemsize = jnp.dtype(feat.dtype).itemsize
    plan = _choose_plan(p, c, nyx, batch_size, itemsize)
    p_pad, nyx_pad = plan["p_pad"], plan["nyx_pad"]

    coords = coords.astype(jnp.int32)
    # Global flat column per pillar, precomputed in the (fused, cheap) wrapper.  The batch
    # stride is the PADDED canvas width so padded overhang columns never alias batch b+1.
    gidx = coords[:, 0] * nyx_pad + coords[:, 2] * nx + coords[:, 3]     # (P,)
    pad = p_pad - p
    if pad:
        gidx = jnp.pad(gidx, (0, pad), constant_values=-1)               # never matches
        feat = jnp.pad(feat, ((0, pad), (0, 0)))                         # zero features
    gidx = gidx.reshape(p_pad, 1)
    featT = jnp.transpose(feat, (1, 0))                                  # (C, P_pad)

    if plan["mode"] == "small":
        # One invocation, no grid: whole canvas resident in VMEM, one MXU matmul.
        kernel = functools.partial(_small_kernel,
                                   batch_size=batch_size, nyx_pad=nyx_pad)
        canvas = pl.pallas_call(
            kernel,
            out_shape=jax.ShapeDtypeStruct((batch_size, c, nyx_pad), out_dtype),
        )(gidx, featT)
    else:
        # TODO(synk): for very large canvases an inverse-index gather (cell -> pillar id via
        # PrefetchScalarGridSpec) would replace the O(C*P*nyx) one-hot matmul; matmul path
        # kept here since it covers the module spec at all tested sizes.
        p_tile, col_tile = plan["p_tile"], plan["col_tile"]
        kernel = functools.partial(_tiled_kernel, nyx_pad=nyx_pad, col_tile=col_tile)
        canvas = pl.pallas_call(
            kernel,
            out_shape=jax.ShapeDtypeStruct((batch_size, c, nyx_pad), out_dtype),
            grid=(batch_size, nyx_pad // col_tile, p_pad // p_tile),
            in_specs=[
                pl.BlockSpec((p_tile, 1), lambda b, j, k: (k, 0)),
                pl.BlockSpec((c, p_tile), lambda b, j, k: (0, k)),
            ],
            out_specs=pl.BlockSpec((1, c, col_tile), lambda b, j, k: (b, 0, j)),
            scratch_shapes=[pltpu.VMEM((c, col_tile), jnp.float32)],
            compiler_params=pltpu.CompilerParams(
                dimension_semantics=("parallel", "parallel", "arbitrary"),
                vmem_limit_bytes=_TILED_VMEM_LIMIT),
        )(gidx, featT)

    if nyx_pad != nyx:
        canvas = canvas[:, :, :nyx]
    return canvas.reshape(batch_size, c, ny, nx)


# ---------------------------------------------------------------------- module wrapper
class PointPillarsScatterPallas:
    def __init__(self, output_shape, num_input_features=64, compute_dtype=None):
        self.name = "PointPillarsScatter"
        self.output_shape = output_shape
        self.ny = output_shape[2]
        self.nx = output_shape[3]
        self.n_channels_out = num_input_features
        self.compute_dtype = compute_dtype

    def __call__(self, voxel_features, coords, batch_size, map_fm=None):
        out = pointpillars_scatter_pallas(voxel_features, coords, batch_size,
                                          self.ny, self.nx,
                                          compute_dtype=self.compute_dtype)
        if map_fm is not None:
            # Plain-JAX layout glue (squeeze / permute / concat of an external map).
            if map_fm.ndim == 5:
                map_fm = jnp.squeeze(map_fm, 3)
            map_fm = jnp.transpose(map_fm, (0, 3, 2, 1))
            out = jnp.concatenate([out, map_fm], axis=1)
        return out


# ----------------------------------------------------------------- pure-JAX reference
def reference_forward(voxel_features, coords, batch_size, ny, nx):
    c = voxel_features.shape[1]
    dense = jnp.zeros((batch_size, ny * nx, c), voxel_features.dtype)
    idx = coords[:, 2] * nx + coords[:, 3]
    dense = dense.at[coords[:, 0], idx, :].set(voxel_features)
    return jnp.transpose(dense.reshape(batch_size, ny, nx, c), (0, 3, 1, 2))


if __name__ == "__main__":
    key = jax.random.PRNGKey(0)
    k_feat, k_coord = jax.random.split(key, 2)

    batch_size = 2
    C = 64                       # module default num_input_features
    ny, nx = 16, 16              # small spatial grid
    n_voxels = 100

    output_shape = [batch_size, 1, ny, nx, C]   # only [2]=ny and [3]=nx are used
    scatter = PointPillarsScatterPallas(output_shape, num_input_features=C)

    voxel_features = jax.random.normal(k_feat, (n_voxels, C), jnp.float32)
    # unique (batch, y, x) pillar coordinates, z = 0, matching PointPillars conventions
    flat = jax.random.permutation(k_coord, batch_size * ny * nx)[:n_voxels]
    b_idx, y_idx, x_idx = jnp.unravel_index(flat, (batch_size, ny, nx))
    coords = jnp.stack([b_idx, jnp.zeros_like(b_idx), y_idx, x_idx],
                       axis=-1).astype(jnp.int32)

    out = scatter(voxel_features, coords, batch_size, map_fm=None)
    out = jax.block_until_ready(out)
    assert out.shape == (batch_size, C, ny, nx), out.shape

    ref = reference_forward(voxel_features, coords, batch_size, ny, nx)
    max_err = float(jnp.max(jnp.abs(out - ref)))
    assert max_err < 1e-3, f"max abs err {max_err}"

    print("KERNEL_OK")
</pallas_src>

<mosaic_0001>
module attributes {stable_mosaic.version = 11 : i64} {
  func.func @_small_kernel(%arg0: memref<128x1xi32, #tpu.memory_space<vmem>>, %arg1: memref<64x128xf32, #tpu.memory_space<vmem>>, %arg2: memref<2x64x256xf32, #tpu.memory_space<vmem>>) attributes {dimension_semantics = [], scalar_prefetch = 0 : i64, scratch_operands = 0 : i64, tpu.core_type = #tpu.core_type<tc>} {
    %c0 = arith.constant 0 : index
    %c0_0 = arith.constant 0 : index
    %0 = vector.load %arg0[%c0, %c0_0] : memref<128x1xi32, #tpu.memory_space<vmem>>, vector<128x1xi32>
    %1 = tpu.iota {dimensions = array<i32: 1>} : vector<1x512xi32>
    %2 = vector.broadcast %1 : vector<1x512xi32> to vector<128x512xi32>
    %3 = vector.broadcast %0 : vector<128x1xi32> to vector<128x512xi32>
    %4 = arith.cmpi eq, %2, %3 : vector<128x512xi32>
    %5 = arith.extui %4 : vector<128x512xi1> to vector<128x512xi32>
    %6 = arith.sitofp %5 : vector<128x512xi32> to vector<128x512xf32>
    %c0_1 = arith.constant 0 : index
    %c0_2 = arith.constant 0 : index
    %7 = vector.load %arg1[%c0_1, %c0_2] : memref<64x128xf32, #tpu.memory_space<vmem>>, vector<64x128xf32>
    %cst = arith.constant dense<0.000000e+00> : vector<64x512xf32>
    %8 = tpu.matmul %7, %6, %cst {dimension_numbers = #tpu.dot_dimension_numbers<[1], [0], [0], [1], [0, 0, 1, 1], [], []>} : vector<64x128xf32>, vector<128x512xf32>, vector<64x512xf32> -> vector<64x512xf32>
    %9 = vector.extract_strided_slice %8 {offsets = [0, 0], sizes = [64, 256], strides = [1, 1]} : vector<64x512xf32> to vector<64x256xf32>
    %c0_3 = arith.constant 0 : index
    %c0_4 = arith.constant 0 : index
    %c0_5 = arith.constant 0 : index
    %10 = vector.load %arg2[%c0_3, %c0_4, %c0_5] : memref<2x64x256xf32, #tpu.memory_space<vmem>>, vector<1x64x256xf32>
    %11 = vector.shape_cast %10 : vector<1x64x256xf32> to vector<64x256xf32>
    %12 = vector.shape_cast %9 : vector<64x256xf32> to vector<1x64x256xf32>
    tpu.vector_store %arg2[%c0_3, %c0_4, %c0_5], %12 {strides = array<i32>} : memref<2x64x256xf32, #tpu.memory_space<vmem>>, vector<1x64x256xf32>,
    %13 = vector.extract_strided_slice %8 {offsets = [0, 256], sizes = [64, 256], strides = [1, 1]} : vector<64x512xf32> to vector<64x256xf32>
    %c1 = arith.constant 1 : index
    %c0_6 = arith.constant 0 : index
    %c0_7 = arith.constant 0 : index
    %14 = vector.load %arg2[%c1, %c0_6, %c0_7] : memref<2x64x256xf32, #tpu.memory_space<vmem>>, vector<1x64x256xf32>
    %15 = vector.shape_cast %14 : vector<1x64x256xf32> to vector<64x256xf32>
    %16 = vector.shape_cast %13 : vector<64x256xf32> to vector<1x64x256xf32>
    tpu.vector_store %arg2[%c1, %c0_6, %c0_7], %16 {strides = array<i32>} : memref<2x64x256xf32, #tpu.memory_space<vmem>>, vector<1x64x256xf32>,
    return
  }
}

</mosaic_0001>

<llo_original>
// kernel: tpu_custom_call.1
$region0: #{tpu_custom_call.1}
  #allocation0 [shape = 'u32[]', space=smem, size = 0x4, offset = 0x4, fixed_abs, tag = 'smem constant byte address 0x4 - core index']
  #allocation1 [shape = 'u32[144,128]{1,0:T(1,128)}', space=vmem, size = 0x12000, scoped, tag = 'internal scratch']
  %s0 = inlined_call_operand.vmem [shape: s32[128,1], index: 0, kind: input, shape index: {}]
  %s1 = inlined_call_operand.vmem [shape: f32[64,128], index: 1, kind: input, shape index: {}]
  %s2 = inlined_call_operand.hbm [shape: f32[2,64,256], index: 2, kind: output, shape index: {}]
  %s3 = sld [smem:[#allocation0]]
  $region18: #{tpu_custom_call.1} parent=0
    _
  %s5 = ssub.s32 1, %s3
  %s6 = scalar_select 0, %s5, %s3
  $region1: #{tpu_custom_call.1} parent=0
    #allocation2 [shape = 'u8[131072]{0}', space=vmem, size = 0x20000, scoped, tag = 'output window, operand 0, single buffered']
    #allocation3 [shape = 's32[1]{0}', space=sflag, size = 0x4, scoped, tag = 'scoped memory for tpu_custom_call.1']
    %7 = vsyncpa [#allocation3], 0
    // Predicated region
    $region2: #{tpu_custom_call.1} parent=1 // pred_check
      _
    $region3: #{tpu_custom_call.1} parent=1 // pred_check_branch
      %9 = sbr.rel (0) target = $region5
    $region4: #{tpu_custom_call.1} parent=1 // pred_region
      _
    $region5: #{tpu_custom_call.1} parent=1 // pred_fallthru
      _
    // Predicated region
    $region6: #{tpu_custom_call.1} parent=1 // pred_check
      _
    $region7: #{tpu_custom_call.1} parent=1 // pred_check_branch
      %11 = sbr.rel (0) target = $region9
    $region8: #{tpu_custom_call.1} parent=1 // pred_region
      _
    $region9: #{tpu_custom_call.1} parent=1 // pred_fallthru
      _
    %v12 = vld [vmem:[%s0] sm:$0xff]
    %v13 = vld [vmem:[%s0 + $0x8] sm:$0xff]
    %v14 = vld [vmem:[%s0 + $0x10] sm:$0xff]
    %v15 = vld [vmem:[%s0 + $0x18] sm:$0xff]
    %v16 = vld [vmem:[%s0 + $0x20] sm:$0xff]
    %v17 = vld [vmem:[%s0 + $0x28] sm:$0xff]
    %v18 = vld [vmem:[%s0 + $0x30] sm:$0xff]
    %v19 = vld [vmem:[%s0 + $0x38] sm:$0xff]
    %v20 = vld [vmem:[%s0 + $0x40] sm:$0xff]
    %v21 = vld [vmem:[%s0 + $0x48] sm:$0xff]
    %v22 = vld [vmem:[%s0 + $0x50] sm:$0xff]
    %v23 = vld [vmem:[%s0 + $0x58] sm:$0xff]
    %v24 = vld [vmem:[%s0 + $0x60] sm:$0xff]
    %v25 = vld [vmem:[%s0 + $0x68] sm:$0xff]
    %v26 = vld [vmem:[%s0 + $0x70] sm:$0xff]
    %v27 = vld [vmem:[%s0 + $0x78] sm:$0xff]
    %v28 = vlaneseq
    %v29 = vand.u32 %v28, 127
    %v30 = vadd.s32 %v29, 128
    %v31 = vadd.s32 %v29, 256
    %v32 = vadd.s32 %v29, 384
    %33 = vset.pattern.permute.xlu0 0
    %34 = vperm.xlu0 %33, %v12
    %v35 = vpop.permute.xlu0 %34
    %36 = vset.pattern.permute.xlu0 0
    %37 = vperm.xlu0 %36, %v13
    %v38 = vpop.permute.xlu0 %37
    %39 = vset.pattern.permute.xlu0 0
    %40 = vperm.xlu0 %39, %v14
    %v41 = vpop.permute.xlu0 %40
    %42 = vset.pattern.permute.xlu0 0
    %43 = vperm.xlu0 %42, %v15
    %v44 = vpop.permute.xlu0 %43
    %45 = vset.pattern.permute.xlu0 0
    %46 = vperm.xlu0 %45, %v16
    %v47 = vpop.permute.xlu0 %46
    %48 = vset.pattern.permute.xlu0 0
    %49 = vperm.xlu0 %48, %v17
    %v50 = vpop.permute.xlu0 %49
    %51 = vset.pattern.permute.xlu0 0
    %52 = vperm.xlu0 %51, %v18
    %v53 = vpop.permute.xlu0 %52
    %54 = vset.pattern.permute.xlu0 0
    %55 = vperm.xlu0 %54, %v19
    %v56 = vpop.permute.xlu0 %55
    %57 = vset.pattern.permute.xlu0 0
    %58 = vperm.xlu0 %57, %v20
    %v59 = vpop.permute.xlu0 %58
    %60 = vset.pattern.permute.xlu0 0
    %61 = vperm.xlu0 %60, %v21
    %v62 = vpop.permute.xlu0 %61
    %63 = vset.pattern.permute.xlu0 0
    %64 = vperm.xlu0 %63, %v22
    %v65 = vpop.permute.xlu0 %64
    %66 = vset.pattern.permute.xlu0 0
    %67 = vperm.xlu0 %66, %v23
    %v68 = vpop.permute.xlu0 %67
    %69 = vset.pattern.permute.xlu0 0
    %70 = vperm.xlu0 %69, %v24
    %v71 = vpop.permute.xlu0 %70
    %72 = vset.pattern.permute.xlu0 0
    %73 = vperm.xlu0 %72, %v25
    %v74 = vpop.permute.xlu0 %73
    %75 = vset.pattern.permute.xlu0 0
    %76 = vperm.xlu0 %75, %v26
    %v77 = vpop.permute.xlu0 %76
    %78 = vset.pattern.permute.xlu0 0
    %79 = vperm.xlu0 %78, %v27
    %v80 = vpop.permute.xlu0 %79
    %vm81 = vcmp.eq.s32.totalorder %v29, %v35
    %vm82 = vcmp.eq.s32.totalorder %v30, %v35
    %vm83 = vcmp.eq.s32.totalorder %v31, %v35
    %vm84 = vcmp.eq.s32.totalorder %v32, %v35
    %vm85 = vcmp.eq.s32.totalorder %v29, %v38
    %vm86 = vcmp.eq.s32.totalorder %v30, %v38
    %vm87 = vcmp.eq.s32.totalorder %v31, %v38
    %vm88 = vcmp.eq.s32.totalorder %v32, %v38
    %vm89 = vcmp.eq.s32.totalorder %v29, %v41
    %vm90 = vcmp.eq.s32.totalorder %v30, %v41
    %vm91 = vcmp.eq.s32.totalorder %v31, %v41
    %vm92 = vcmp.eq.s32.totalorder %v32, %v41
    %vm93 = vcmp.eq.s32.totalorder %v29, %v44
    %vm94 = vcmp.eq.s32.totalorder %v30, %v44
    %vm95 = vcmp.eq.s32.totalorder %v31, %v44
    %vm96 = vcmp.eq.s32.totalorder %v32, %v44
    %vm97 = vcmp.eq.s32.totalorder %v29, %v47
    %vm98 = vcmp.eq.s32.totalorder %v30, %v47
    %vm99 = vcmp.eq.s32.totalorder %v31, %v47
    %vm100 = vcmp.eq.s32.totalorder %v32, %v47
    %vm101 = vcmp.eq.s32.totalorder %v29, %v50
    %vm102 = vcmp.eq.s32.totalorder %v30, %v50
    %vm103 = vcmp.eq.s32.totalorder %v31, %v50
    %vm104 = vcmp.eq.s32.totalorder %v32, %v50
    %vm105 = vcmp.eq.s32.totalorder %v29, %v53
    %vm106 = vcmp.eq.s32.totalorder %v30, %v53
    %vm107 = vcmp.eq.s32.totalorder %v31, %v53
    %vm108 = vcmp.eq.s32.totalorder %v32, %v53
    %vm109 = vcmp.eq.s32.totalorder %v29, %v56
    %vm110 = vcmp.eq.s32.totalorder %v30, %v56
    %vm111 = vcmp.eq.s32.totalorder %v31, %v56
    %vm112 = vcmp.eq.s32.totalorder %v32, %v56
    %vm113 = vcmp.eq.s32.totalorder %v29, %v59
    %vm114 = vcmp.eq.s32.totalorder %v30, %v59
    %vm115 = vcmp.eq.s32.totalorder %v31, %v59
    %vm116 = vcmp.eq.s32.totalorder %v32, %v59
    %vm117 = vcmp.eq.s32.totalorder %v29, %v62
    %vm118 = vcmp.eq.s32.totalorder %v30, %v62
    %vm119 = vcmp.eq.s32.totalorder %v31, %v62
    %vm120 = vcmp.eq.s32.totalorder %v32, %v62
    %vm121 = vcmp.eq.s32.totalorder %v29, %v65
    %vm122 = vcmp.eq.s32.totalorder %v30, %v65
    %vm123 = vcmp.eq.s32.totalorder %v31, %v65
    %vm124 = vcmp.eq.s32.totalorder %v32, %v65
    %vm125 = vcmp.eq.s32.totalorder %v29, %v68
    %vm126 = vcmp.eq.s32.totalorder %v30, %v68
    %vm127 = vcmp.eq.s32.totalorder %v31, %v68
    %vm128 = vcmp.eq.s32.totalorder %v32, %v68
    %vm129 = vcmp.eq.s32.totalorder %v29, %v71
    %vm130 = vcmp.eq.s32.totalorder %v30, %v71
    %vm131 = vcmp.eq.s32.totalorder %v31, %v71
    %vm132 = vcmp.eq.s32.totalorder %v32, %v71
    %vm133 = vcmp.eq.s32.totalorder %v29, %v74
    %vm134 = vcmp.eq.s32.totalorder %v30, %v74
    %vm135 = vcmp.eq.s32.totalorder %v31, %v74
    %vm136 = vcmp.eq.s32.totalorder %v32, %v74
    %vm137 = vcmp.eq.s32.totalorder %v29, %v77
    %vm138 = vcmp.eq.s32.totalorder %v30, %v77
    %vm139 = vcmp.eq.s32.totalorder %v31, %v77
    %vm140 = vcmp.eq.s32.totalorder %v32, %v77
    %vm141 = vcmp.eq.s32.totalorder %v29, %v80
    %vm142 = vcmp.eq.s32.totalorder %v30, %v80
    %vm143 = vcmp.eq.s32.totalorder %v31, %v80
    %vm144 = vcmp.eq.s32.totalorder %v32, %v80
    %v145 = vsel %vm81, 1, 0
    %v146 = vsel %vm82, 1, 0
    %v147 = vsel %vm83, 1, 0
    %v148 = vsel %vm84, 1, 0
    %v149 = vsel %vm85, 1, 0
    %v150 = vsel %vm86, 1, 0
    %v151 = vsel %vm87, 1, 0
    %v152 = vsel %vm88, 1, 0
    %v153 = vsel %vm89, 1, 0
    %v154 = vsel %vm90, 1, 0
    %v155 = vsel %vm91, 1, 0
    %v156 = vsel %vm92, 1, 0
    %v157 = vsel %vm93, 1, 0
    %v158 = vsel %vm94, 1, 0
    %v159 = vsel %vm95, 1, 0
    %v160 = vsel %vm96, 1, 0
    %v161 = vsel %vm97, 1, 0
    %v162 = vsel %vm98, 1, 0
    %v163 = vsel %vm99, 1, 0
    %v164 = vsel %vm100, 1, 0
    %v165 = vsel %vm101, 1, 0
    %v166 = vsel %vm102, 1, 0
    %v167 = vsel %vm103, 1, 0
    %v168 = vsel %vm104, 1, 0
    %v169 = vsel %vm105, 1, 0
    %v170 = vsel %vm106, 1, 0
    %v171 = vsel %vm107, 1, 0
    %v172 = vsel %vm108, 1, 0
    %v173 = vsel %vm109, 1, 0
    %v174 = vsel %vm110, 1, 0
    %v175 = vsel %vm111, 1, 0
    %v176 = vsel %vm112, 1, 0
    %v177 = vsel %vm113, 1, 0
    %v178 = vsel %vm114, 1, 0
    %v179 = vsel %vm115, 1, 0
    %v180 = vsel %vm116, 1, 0
    %v181 = vsel %vm117, 1, 0
    %v182 = vsel %vm118, 1, 0
    %v183 = vsel %vm119, 1, 0
    %v184 = vsel %vm120, 1, 0
    %v185 = vsel %vm121, 1, 0
    %v186 = vsel %vm122, 1, 0
    %v187 = vsel %vm123, 1, 0
    %v188 = vsel %vm124, 1, 0
    %v189 = vsel %vm125, 1, 0
    %v190 = vsel %vm126, 1, 0
    %v191 = vsel %vm127, 1, 0
    %v192 = vsel %vm128, 1, 0
    %v193 = vsel %vm129, 1, 0
    %v194 = vsel %vm130, 1, 0
    %v195 = vsel %vm131, 1, 0
    %v196 = vsel %vm132, 1, 0
    %v197 = vsel %vm133, 1, 0
    %v198 = vsel %vm134, 1, 0
    %v199 = vsel %vm135, 1, 0
    %v200 = vsel %vm136, 1, 0
    %v201 = vsel %vm137, 1, 0
    %v202 = vsel %vm138, 1, 0
    %v203 = vsel %vm139, 1, 0
    %v204 = vsel %vm140, 1, 0
    %v205 = vsel %vm141, 1, 0
    %v206 = vsel %vm142, 1, 0
    %v207 = vsel %vm143, 1, 0
    %v208 = vsel %vm144, 1, 0
    %v209 = vcvt.s32.f32 %v145
    %v210 = vcvt.s32.f32 %v146
    %v211 = vcvt.s32.f32 %v147
    %v212 = vcvt.s32.f32 %v148
    %v213 = vcvt.s32.f32 %v149
    %v214 = vcvt.s32.f32 %v150
    %v215 = vcvt.s32.f32 %v151
    %v216 = vcvt.s32.f32 %v152
    %v217 = vcvt.s32.f32 %v153
    %v218 = vcvt.s32.f32 %v154
    %v219 = vcvt.s32.f32 %v155
    %v220 = vcvt.s32.f32 %v156
    %v221 = vcvt.s32.f32 %v157
    %v222 = vcvt.s32.f32 %v158
    %v223 = vcvt.s32.f32 %v159
    %v224 = vcvt.s32.f32 %v160
    %v225 = vcvt.s32.f32 %v161
    %v226 = vcvt.s32.f32 %v162
    %v227 = vcvt.s32.f32 %v163
    %v228 = vcvt.s32.f32 %v164
    %v229 = vcvt.s32.f32 %v165
    %v230 = vcvt.s32.f32 %v166
    %v231 = vcvt.s32.f32 %v167
    %v232 = vcvt.s32.f32 %v168
    %v233 = vcvt.s32.f32 %v169
    %v234 = vcvt.s32.f32 %v170
    %v235 = vcvt.s32.f32 %v171
    %v236 = vcvt.s32.f32 %v172
    %v237 = vcvt.s32.f32 %v173
    %v238 = vcvt.s32.f32 %v174
    %v239 = vcvt.s32.f32 %v175
    %v240 = vcvt.s32.f32 %v176
    %v241 = vcvt.s32.f32 %v177
    %v242 = vcvt.s32.f32 %v178
    %v243 = vcvt.s32.f32 %v179
    %v244 = vcvt.s32.f32 %v180
    %v245 = vcvt.s32.f32 %v181
    %v246 = vcvt.s32.f32 %v182
    %v247 = vcvt.s32.f32 %v183
    %v248 = vcvt.s32.f32 %v184
    %v249 = vcvt.s32.f32 %v185
    %v250 = vcvt.s32.f32 %v186
    %v251 = vcvt.s32.f32 %v187
    %v252 = vcvt.s32.f32 %v188
    %v253 = vcvt.s32.f32 %v189
    %v254 = vcvt.s32.f32 %v190
    %v255 = vcvt.s32.f32 %v191
    %v256 = vcvt.s32.f32 %v192
    %v257 = vcvt.s32.f32 %v193
    %v258 = vcvt.s32.f32 %v194
    %v259 = vcvt.s32.f32 %v195
    %v260 = vcvt.s32.f32 %v196
    %v261 = vcvt.s32.f32 %v197
    %v262 = vcvt.s32.f32 %v198
    %v263 = vcvt.s32.f32 %v199
    %v264 = vcvt.s32.f32 %v200
    %v265 = vcvt.s32.f32 %v201
    %v266 = vcvt.s32.f32 %v202
    %v267 = vcvt.s32.f32 %v203
    %v268 = vcvt.s32.f32 %v204
    %v269 = vcvt.s32.f32 %v205
    %v270 = vcvt.s32.f32 %v206
    %v271 = vcvt.s32.f32 %v207
    %v272 = vcvt.s32.f32 %v208
    %v273 = vld [vmem:[%s1] sm:$0xff]
    %v274 = vld [vmem:[%s1 + $0x8] sm:$0xff]
    %v275 = vld [vmem:[%s1 + $0x10] sm:$0xff]
    %v276 = vld [vmem:[%s1 + $0x18] sm:$0xff]
    %v277 = vld [vmem:[%s1 + $0x20] sm:$0xff]
    %v278 = vld [vmem:[%s1 + $0x28] sm:$0xff]
    %v279 = vld [vmem:[%s1 + $0x30] sm:$0xff]
    %v280 = vld [vmem:[%s1 + $0x38] sm:$0xff]
    %281 = vmatprep.subr.mxu0 %v270
    %282 = vmatpush1.msra.mxu0 %v269
    %283 = vmatprep.subr.mxu0 %v266
    %284 = vmatpush1.msra.mxu0 %v265
    %285 = vmatprep.subr.mxu0 %v262
    %286 = vmatpush1.msra.mxu0 %v261
    %287 = vmatprep.subr.mxu0 %v258
    %288 = vmatpush1.msra.mxu0 %v257
    %289 = vmatprep.subr.mxu0 %v254
    %290 = vmatpush1.msra.mxu0 %v253
    %291 = vmatprep.subr.mxu0 %v250
    %292 = vmatpush1.msra.mxu0 %v249
    %293 = vmatprep.subr.mxu0 %v246
    %294 = vmatpush1.msra.mxu0 %v245
    %295 = vmatprep.subr.mxu0 %v242
    %296 = vmatpush1.msra.mxu0 %v241
    %297 = vmatprep.subr.mxu0 %v238
    %298 = vmatpush1.msra.mxu0 %v237
    %299 = vmatprep.subr.mxu0 %v234
    %300 = vmatpush1.msra.mxu0 %v233
    %301 = vmatprep.subr.mxu0 %v230
    %302 = vmatpush1.msra.mxu0 %v229
    %303 = vmatprep.subr.mxu0 %v226
    %304 = vmatpush1.msra.mxu0 %v225
    %305 = vmatprep.subr.mxu0 %v222
    %306 = vmatpush1.msra.mxu0 %v221
    %307 = vmatprep.subr.mxu0 %v218
    %308 = vmatpush1.msra.mxu0 %v217
    %309 = vmatprep.subr.mxu0 %v214
    %310 = vmatpush1.msra.mxu0 %v213
    %311 = vmatprep.subr.mxu0 %v210
    %312 = vmatpush1.msra.mxu0 %v209
    %313 = vmatprep.subr.mxu0 0.0
    %314 = vmatpush2.msra.mxu0 0.0
    %315 = vmatprep.subr.mxu0 0.0
    %316 = vmatpush2.msra.mxu0 0.0
    %317 = vmatprep.subr.mxu0 0.0
    %318 = vmatpush2.msra.mxu0 0.0
    %319 = vmatprep.subr.mxu0 0.0
    %320 = vmatpush2.msra.mxu0 0.0
    %321 = vmatprep.subr.mxu0 0.0
    %322 = vmatpush2.msra.mxu0 0.0
    %323 = vmatprep.subr.mxu0 0.0
    %324 = vmatpush2.msra.mxu0 0.0
    %325 = vmatprep.subr.mxu0 0.0
    %326 = vmatpush2.msra.mxu0 0.0
    %327 = vmatprep.subr.mxu0 0.0
    %328 = vmatpush2.msra.mxu0 0.0
    %329 = vmatprep.subr.mxu0 0.0
    %330 = vmatpush2.msra.mxu0 0.0
    %331 = vmatprep.subr.mxu0 0.0
    %332 = vmatpush2.msra.mxu0 0.0
    %333 = vmatprep.subr.mxu0 0.0
    %334 = vmatpush2.msra.mxu0 0.0
    %335 = vmatprep.subr.mxu0 0.0
    %336 = vmatpush2.msra.mxu0 0.0
    %337 = vmatprep.subr.mxu0 0.0
    %338 = vmatpush2.msra.mxu0 0.0
    %339 = vmatprep.subr.mxu0 0.0
    %340 = vmatpush2.msra.mxu0 0.0
    %341 = vmatprep.subr.mxu0 0.0
    %342 = vmatpush2.msra.mxu0 0.0
    %343 = vmatprep.subr.mxu0 0.0
    %344 = vmatpush2.msra.mxu0 0.0
    %345 = vmatprep.mubr.f32.mxu0 0.0
    %346 = vmatmul.mubr.f32.gmra.mxu0 %v273
    %v347 = vpop.f32.mrf.mxu0
    %v348 = vadd.f32 0.0, %v347
    %v349 = vpop.f32.mrf.mxu0
    %v350 = vadd.f32 0.0, %v349
    %351 = vmatprep.mubr.f32.mxu0 0.0
    %352 = vmatmul.mubr.f32.gmra.mxu0 %v274
    %v353 = vpop.f32.mrf.mxu0
    %v354 = vadd.f32 0.0, %v353
    %v355 = vpop.f32.mrf.mxu0
    %v356 = vadd.f32 0.0, %v355
    %357 = vmatprep.mubr.f32.mxu0 0.0
    %358 = vmatmul.mubr.f32.gmra.mxu0 %v275
    %v359 = vpop.f32.mrf.mxu0
    %v360 = vadd.f32 0.0, %v359
    %v361 = vpop.f32.mrf.mxu0
    %v362 = vadd.f32 0.0, %v361
    %363 = vmatprep.mubr.f32.mxu0 0.0
    %364 = vmatmul.mubr.f32.gmra.mxu0 %v276
    %v365 = vpop.f32.mrf.mxu0
    %v366 = vadd.f32 0.0, %v365
    %v367 = vpop.f32.mrf.mxu0
    %v368 = vadd.f32 0.0, %v367
    %369 = vmatprep.mubr.f32.mxu0 0.0
    %370 = vmatmul.mubr.f32.gmra.mxu0 %v277
    %v371 = vpop.f32.mrf.mxu0
    %v372 = vadd.f32 0.0, %v371
    %v373 = vpop.f32.mrf.mxu0
    %v374 = vadd.f32 0.0, %v373
    %375 = vmatprep.mubr.f32.mxu0 0.0
    %376 = vmatmul.mubr.f32.gmra.mxu0 %v278
    %v377 = vpop.f32.mrf.mxu0
    %v378 = vadd.f32 0.0, %v377
    %v379 = vpop.f32.mrf.mxu0
    %v380 = vadd.f32 0.0, %v379
    %381 = vmatprep.mubr.f32.mxu0 0.0
    %382 = vmatmul.mubr.f32.gmra.mxu0 %v279
    %v383 = vpop.f32.mrf.mxu0
    %v384 = vadd.f32 0.0, %v383
    %v385 = vpop.f32.mrf.mxu0
    %v386 = vadd.f32 0.0, %v385
    %387 = vmatprep.mubr.f32.mxu0 0.0
    %388 = vmatmul.mubr.f32.gmra.mxu0 %v280
    %v389 = vpop.f32.mrf.mxu0
    %v390 = vadd.f32 0.0, %v389
    %v391 = vpop.f32.mrf.mxu0
    %v392 = vadd.f32 0.0, %v391
    %393 = vdwg.mxu0
    %394 = vmatprep.subr.mxu0 %v272
    %395 = vmatpush1.msra.mxu0 %v271
    %396 = vmatprep.subr.mxu0 %v268
    %397 = vmatpush1.msra.mxu0 %v267
    %398 = vmatprep.subr.mxu0 %v264
    %399 = vmatpush1.msra.mxu0 %v263
    %400 = vmatprep.subr.mxu0 %v260
    %401 = vmatpush1.msra.mxu0 %v259
    %402 = vmatprep.subr.mxu0 %v256
    %403 = vmatpush1.msra.mxu0 %v255
    %404 = vmatprep.subr.mxu0 %v252
    %405 = vmatpush1.msra.mxu0 %v251
    %406 = vmatprep.subr.mxu0 %v248
    %407 = vmatpush1.msra.mxu0 %v247
    %408 = vmatprep.subr.mxu0 %v244
    %409 = vmatpush1.msra.mxu0 %v243
    %410 = vmatprep.subr.mxu0 %v240
    %411 = vmatpush1.msra.mxu0 %v239
    %412 = vmatprep.subr.mxu0 %v236
    %413 = vmatpush1.msra.mxu0 %v235
    %414 = vmatprep.subr.mxu0 %v232
    %415 = vmatpush1.msra.mxu0 %v231
    %416 = vmatprep.subr.mxu0 %v228
    %417 = vmatpush1.msra.mxu0 %v227
    %418 = vmatprep.subr.mxu0 %v224
    %419 = vmatpush1.msra.mxu0 %v223
    %420 = vmatprep.subr.mxu0 %v220
    %421 = vmatpush1.msra.mxu0 %v219
    %422 = vmatprep.subr.mxu0 %v216
    %423 = vmatpush1.msra.mxu0 %v215
    %424 = vmatprep.subr.mxu0 %v212
    %425 = vmatpush1.msra.mxu0 %v211
    %426 = vmatprep.subr.mxu0 0.0
    %427 = vmatpush2.msra.mxu0 0.0
    %428 = vmatprep.subr.mxu0 0.0
    %429 = vmatpush2.msra.mxu0 0.0
    %430 = vmatprep.subr.mxu0 0.0
    %431 = vmatpush2.msra.mxu0 0.0
    %432 = vmatprep.subr.mxu0 0.0
    %433 = vmatpush2.msra.mxu0 0.0
    %434 = vmatprep.subr.mxu0 0.0
    %435 = vmatpush2.msra.mxu0 0.0
    %436 = vmatprep.subr.mxu0 0.0
    %437 = vmatpush2.msra.mxu0 0.0
    %438 = vmatprep.subr.mxu0 0.0
    %439 = vmatpush2.msra.mxu0 0.0
    %440 = vmatprep.subr.mxu0 0.0
    %441 = vmatpush2.msra.mxu0 0.0
    %442 = vmatprep.subr.mxu0 0.0
    %443 = vmatpush2.msra.mxu0 0.0
    %444 = vmatprep.subr.mxu0 0.0
    %445 = vmatpush2.msra.mxu0 0.0
    %446 = vmatprep.subr.mxu0 0.0
    %447 = vmatpush2.msra.mxu0 0.0
    %448 = vmatprep.subr.mxu0 0.0
    %449 = vmatpush2.msra.mxu0 0.0
    %450 = vmatprep.subr.mxu0 0.0
    %451 = vmatpush2.msra.mxu0 0.0
    %452 = vmatprep.subr.mxu0 0.0
    %453 = vmatpush2.msra.mxu0 0.0
    %454 = vmatprep.subr.mxu0 0.0
    %455 = vmatpush2.msra.mxu0 0.0
    %456 = vmatprep.subr.mxu0 0.0
    %457 = vmatpush2.msra.mxu0 0.0
    %458 = vmatprep.mubr.f32.mxu0 0.0
    %459 = vmatmul.mubr.f32.gmra.mxu0 %v273
    %v460 = vpop.f32.mrf.mxu0
    %v461 = vadd.f32 0.0, %v460
    %v462 = vpop.f32.mrf.mxu0
    %v463 = vadd.f32 0.0, %v462
    %464 = vmatprep.mubr.f32.mxu0 0.0
    %465 = vmatmul.mubr.f32.gmra.mxu0 %v274
    %v466 = vpop.f32.mrf.mxu0
    %v467 = vadd.f32 0.0, %v466
    %v468 = vpop.f32.mrf.mxu0
    %v469 = vadd.f32 0.0, %v468
    %470 = vmatprep.mubr.f32.mxu0 0.0
    %471 = vmatmul.mubr.f32.gmra.mxu0 %v275
    %v472 = vpop.f32.mrf.mxu0
    %v473 = vadd.f32 0.0, %v472
    %v474 = vpop.f32.mrf.mxu0
    %v475 = vadd.f32 0.0, %v474
    %476 = vmatprep.mubr.f32.mxu0 0.0
    %477 = vmatmul.mubr.f32.gmra.mxu0 %v276
    %v478 = vpop.f32.mrf.mxu0
    %v479 = vadd.f32 0.0, %v478
    %v480 = vpop.f32.mrf.mxu0
    %v481 = vadd.f32 0.0, %v480
    %482 = vmatprep.mubr.f32.mxu0 0.0
    %483 = vmatmul.mubr.f32.gmra.mxu0 %v277
    %v484 = vpop.f32.mrf.mxu0
    %v485 = vadd.f32 0.0, %v484
    %v486 = vpop.f32.mrf.mxu0
    %v487 = vadd.f32 0.0, %v486
    %488 = vmatprep.mubr.f32.mxu0 0.0
    %489 = vmatmul.mubr.f32.gmra.mxu0 %v278
    %v490 = vpop.f32.mrf.mxu0
    %v491 = vadd.f32 0.0, %v490
    %v492 = vpop.f32.mrf.mxu0
    %v493 = vadd.f32 0.0, %v492
    %494 = vmatprep.mubr.f32.mxu0 0.0
    %495 = vmatmul.mubr.f32.gmra.mxu0 %v279
    %v496 = vpop.f32.mrf.mxu0
    %v497 = vadd.f32 0.0, %v496
    %v498 = vpop.f32.mrf.mxu0
    %v499 = vadd.f32 0.0, %v498
    %500 = vmatprep.mubr.f32.mxu0 0.0
    %501 = vmatmul.mubr.f32.gmra.mxu0 %v280
    %v502 = vpop.f32.mrf.mxu0
    %v503 = vadd.f32 0.0, %v502
    %v504 = vpop.f32.mrf.mxu0
    %v505 = vadd.f32 0.0, %v504
    %506 = vdwg.mxu0
    %507 = vst [vmem:[#allocation2] sm:$0xff] %v348
    %508 = vst [vmem:[#allocation2 + $0x8] sm:$0xff] %v350
    %509 = vst [vmem:[#allocation2 + $0x10] sm:$0xff] %v354
    %510 = vst [vmem:[#allocation2 + $0x18] sm:$0xff] %v356
    %511 = vst [vmem:[#allocation2 + $0x20] sm:$0xff] %v360
    %512 = vst [vmem:[#allocation2 + $0x28] sm:$0xff] %v362
    %513 = vst [vmem:[#allocation2 + $0x30] sm:$0xff] %v366
    %514 = vst [vmem:[#allocation2 + $0x38] sm:$0xff] %v368
    %515 = vst [vmem:[#allocation2 + $0x40] sm:$0xff] %v372
    %516 = vst [vmem:[#allocation2 + $0x48] sm:$0xff] %v374
    %517 = vst [vmem:[#allocation2 + $0x50] sm:$0xff] %v378
    %518 = vst [vmem:[#allocation2 + $0x58] sm:$0xff] %v380
    %519 = vst [vmem:[#allocation2 + $0x60] sm:$0xff] %v384
    %520 = vst [vmem:[#allocation2 + $0x68] sm:$0xff] %v386
    %521 = vst [vmem:[#allocation2 + $0x70] sm:$0xff] %v390
    %522 = vst [vmem:[#allocation2 + $0x78] sm:$0xff] %v392
    %s523 = scalar_lea.vmem [#allocation2], 128
    %524 = vst [vmem:[%s523] sm:$0xff] %v461
    %525 = vst [vmem:[%s523 + $0x8] sm:$0xff] %v463
    %526 = vst [vmem:[%s523 + $0x10] sm:$0xff] %v467
    %527 = vst [vmem:[%s523 + $0x18] sm:$0xff] %v469
    %528 = vst [vmem:[%s523 + $0x20] sm:$0xff] %v473
    %529 = vst [vmem:[%s523 + $0x28] sm:$0xff] %v475
    %530 = vst [vmem:[%s523 + $0x30] sm:$0xff] %v479
    %531 = vst [vmem:[%s523 + $0x38] sm:$0xff] %v481
    %532 = vst [vmem:[%s523 + $0x40] sm:$0xff] %v485
    %533 = vst [vmem:[%s523 + $0x48] sm:$0xff] %v487
    %534 = vst [vmem:[%s523 + $0x50] sm:$0xff] %v491
    %535 = vst [vmem:[%s523 + $0x58] sm:$0xff] %v493
    %536 = vst [vmem:[%s523 + $0x60] sm:$0xff] %v497
    %537 = vst [vmem:[%s523 + $0x68] sm:$0xff] %v499
    %538 = vst [vmem:[%s523 + $0x70] sm:$0xff] %v503
    %539 = vst [vmem:[%s523 + $0x78] sm:$0xff] %v505
    // Predicated region
    $region10: #{tpu_custom_call.1} parent=1 // pred_check
      _
    $region11: #{tpu_custom_call.1} parent=1 // pred_check_branch
      %541 = sbr.rel (0) target = $region13
    $region12: #{tpu_custom_call.1} parent=1 // pred_region
      %s543 = ssub.s32 4096, 4096
      %544 = vsyncadd [#allocation3], %s543
      %s545 = sshll.u32 [#allocation2], 4
      %s546 = int_to_ptr.vmem [resolvable:$true] %s545
      %551 = dma.vmem_to_hbm [thread:$0]  %s546, 4096, %s2, [#allocation3], 256, 256, 16
    $region13: #{tpu_custom_call.1} parent=1 // pred_fallthru
      _
    // Predicated region
    $region14: #{tpu_custom_call.1} parent=1 // pred_check
      _
    $region15: #{tpu_custom_call.1} parent=1 // pred_check_branch
      %553 = sbr.rel (0) target = $region17
    $region16: #{tpu_custom_call.1} parent=1 // pred_region
      %554 = dma.done [#allocation3], 4096
    $region17: #{tpu_custom_call.1} parent=1 // pred_fallthru
      _
    %555 = vsyncpa [#allocation3], 1

</llo_original>
